<compile_context>
chip_gen: v7x
topology: tpu7x:2x2x1
jax: 0.10.0
libtpu: 0.0.40
codegen_flags: <defaults>
</compile_context>

<pallas_src>
import functools

import jax
import jax.numpy as jnp
from jax.experimental import pallas as pl
from jax.experimental.pallas import tpu as pltpu

try:  # current spelling
    _VMEM = pltpu.MemorySpace.VMEM
except AttributeError:  # older jax spelling
    _VMEM = pltpu.TPUMemorySpace.VMEM


def _xw_kernel(xw_ref, o_ref, *, sq, d):
    """Single stacked operand: rows [0:sq] are x, rows [sq:sq+d] are W."""
    x = xw_ref[0:sq, :]            # [Sq, D]  (static, tile-aligned slice)
    w = xw_ref[sq:sq + d, :]       # [D,  D]
    # Everything is f32; write the MXU result directly (no epilogue cast).
    o_ref[...] = jnp.dot(x, w, preferred_element_type=jnp.float32)


@jax.jit
def fused_attn(x, w):
    """x: [1, 1, Sq, D], w: [D, D]  ->  [1, 1, Sq, D] (f32, dtype pinned)."""
    x2 = x[0, 0].astype(jnp.float32)           # [Sq, D]
    w = w.astype(jnp.float32)                  # [D, D]  (pin dtype explicitly)
    sq, d = x2.shape

    # One operand stream: [Sq + D, D].  The concatenate is wrapper-side layout
    # plumbing and fuses into the surrounding jit.
    xw = jnp.concatenate([x2, w], axis=0)

    cost = pl.CostEstimate(
        flops=2 * sq * d * d,
        transcendentals=0,
        bytes_accessed=(sq + d) * d * 4 + sq * d * 4,
    )

    out2 = pl.pallas_call(
        functools.partial(_xw_kernel, sq=sq, d=d),
        out_shape=jax.ShapeDtypeStruct((sq, d), jnp.float32),
        in_specs=[pl.BlockSpec(memory_space=_VMEM)],
        out_specs=pl.BlockSpec(memory_space=_VMEM),
        cost_estimate=cost,
    )(xw)
    return out2[None, None]


def build_buffers(key_rng, scale_factor=1.0 / 10 ** 2, dropout_p=0.2):
    """Deterministically build the module's registered buffers (plain JAX glue)."""
    k_q, k_k, k_v, k_drop = jax.random.split(key_rng, 4)
    query = jax.random.normal(k_q, (1, 1, 16, 8), dtype=jnp.float32)
    key = jax.random.normal(k_k, (1, 1, 8, 8), dtype=jnp.float32)
    value = jax.random.normal(k_v, (1, 1, 16, 8), dtype=jnp.float32)

    qk = jnp.matmul(query, jnp.swapaxes(key, -2, -1))            # [1,1,16,8]
    scaled_qk = qk * scale_factor
    softmax_qk = jax.nn.softmax(scaled_qk, axis=-1)
    # F.dropout(training=True): keep with prob (1-p), scale kept by 1/(1-p).
    # The mask is sampled ONCE here and frozen into the registered buffer,
    # matching the original module (dropout runs in __init__, not forward).
    keep = jax.random.bernoulli(k_drop, p=1.0 - dropout_p, shape=softmax_qk.shape)
    dropout_qk = jnp.where(keep, softmax_qk / (1.0 - dropout_p), 0.0)
    # TODO(synk): original __init__ also computes dropout_qk.matmul(value),
    # which is shape-invalid ([...,16,8] @ [...,16,8]) and unused by forward;
    # skipped here.

    # Fold the two constant buffers into a single [D, D] weight:
    #   (x @ dropout_qk^T) @ value == x @ (dropout_qk^T @ value)
    # NOTE: this re-associates the f32 matmul chain; results differ from the
    # original two-matmul order at the ~1e-5..1e-4 level (tolerance below).
    w = jnp.matmul(dropout_qk[0, 0].T, value[0, 0])              # [8, 8]
    return dropout_qk, value, w


if __name__ == "__main__":
    rng = jax.random.PRNGKey(0)
    rng_buf, rng_x = jax.random.split(rng)
    dropout_qk, value, w = build_buffers(rng_buf)

    x = jax.random.normal(rng_x, (1, 1, 16, 8), dtype=jnp.float32)

    out = jax.block_until_ready(fused_attn(x, w))

    # Reference check (plain JAX, original two-matmul order of the forward).
    ref = jnp.matmul(jnp.matmul(x, jnp.swapaxes(dropout_qk, -2, -1)), value)
    assert out.shape == (1, 1, 16, 8)
    # 1e-4 tolerance absorbs the f32 re-association rounding of the W fold.
    assert jnp.allclose(out, ref, atol=1e-4, rtol=1e-4)
    print("KERNEL_OK")
</pallas_src>

<mosaic_0001>
module attributes {stable_mosaic.version = 11 : i64} {
  func.func @_xw_kernel(%arg0: memref<24x8xf32, #tpu.memory_space<vmem>>, %arg1: memref<16x8xf32, #tpu.memory_space<vmem>>) attributes {dimension_semantics = [], scalar_prefetch = 0 : i64, scratch_operands = 0 : i64, tpu.core_type = #tpu.core_type<tc>} {
    %c0 = arith.constant 0 : index
    %c0_0 = arith.constant 0 : index
    %0 = vector.load %arg0[%c0, %c0_0] : memref<24x8xf32, #tpu.memory_space<vmem>>, vector<16x8xf32>
    %c16 = arith.constant 16 : index
    %c0_1 = arith.constant 0 : index
    %1 = vector.load %arg0[%c16, %c0_1] : memref<24x8xf32, #tpu.memory_space<vmem>>, vector<8x8xf32>
    %cst = arith.constant dense<0.000000e+00> : vector<16x8xf32>
    %2 = tpu.matmul %0, %1, %cst {dimension_numbers = #tpu.dot_dimension_numbers<[1], [0], [0], [1], [0, 0, 1, 1], [], []>} : vector<16x8xf32>, vector<8x8xf32>, vector<16x8xf32> -> vector<16x8xf32>
    %c0_2 = arith.constant 0 : index
    %c0_3 = arith.constant 0 : index
    %3 = vector.load %arg1[%c0_2, %c0_3] : memref<16x8xf32, #tpu.memory_space<vmem>>, vector<16x8xf32>
    tpu.vector_store %arg1[%c0_2, %c0_3], %2 {strides = array<i32>} : memref<16x8xf32, #tpu.memory_space<vmem>>, vector<16x8xf32>,
    return
  }
}

</mosaic_0001>

<llo_original>
// kernel: fused_attn.1
$region0: #{fused_attn.1}
  #allocation0 [shape = 'u32[]', space=smem, size = 0x4, offset = 0x4, fixed_abs, tag = 'smem constant byte address 0x4 - core index']
  #allocation1 [shape = 'u32[144,128]{1,0:T(1,128)}', space=vmem, size = 0x12000, scoped, tag = 'internal scratch']
  %s0 = inlined_call_operand.vmem [shape: f32[24,8], index: 0, kind: input, shape index: {}]
  %s1 = inlined_call_operand.vmem [shape: f32[16,8], index: 1, kind: output, shape index: {}]
  %s2 = sld [smem:[#allocation0]]
  $region14: #{fused_attn.1} parent=0
    _
  %s4 = ssub.s32 1, %s2
  %s5 = scalar_select 0, %s4, %s2
  // Predicated region
  $region2: #{fused_attn.1} parent=0 // pred_check
    _
  $region3: #{fused_attn.1} parent=0 // pred_check_branch
    %7 = sbr.rel (0) target = $region5
  $region4: #{fused_attn.1} parent=0 // pred_region
    _
  $region5: #{fused_attn.1} parent=0 // pred_fallthru
    _
  %v8 = vld [vmem:[%s0] sm:$0xff]
  %v9 = vld [vmem:[%s0 + $0x8] sm:$0xff]
  %v10 = vld [vmem:[%s0 + $0x10] sm:$0xff]
  %vm11 = vcmask 64512
  %v13 = vsel %vm11, %v8, 0
  %v16 = vsel %vm11, %v9, 0
  %18 = vmatprep.subr.mxu0 0.0
  %19 = vmatpush1.msra.mxu0 %v10
  %20 = vmatprep.subr.mxu0 0.0
  %21 = vmatpush1.msra.mxu0 0.0
  %22 = vmatprep.subr.mxu0 0.0
  %23 = vmatpush1.msra.mxu0 0.0
  %24 = vmatprep.subr.mxu0 0.0
  %25 = vmatpush1.msra.mxu0 0.0
  %26 = vmatprep.subr.mxu0 0.0
  %27 = vmatpush1.msra.mxu0 0.0
  %28 = vmatprep.subr.mxu0 0.0
  %29 = vmatpush1.msra.mxu0 0.0
  %30 = vmatprep.subr.mxu0 0.0
  %31 = vmatpush1.msra.mxu0 0.0
  %32 = vmatprep.subr.mxu0 0.0
  %33 = vmatpush1.msra.mxu0 0.0
  %34 = vmatprep.subr.mxu0 0.0
  %35 = vmatpush1.msra.mxu0 0.0
  %36 = vmatprep.subr.mxu0 0.0
  %37 = vmatpush1.msra.mxu0 0.0
  %38 = vmatprep.subr.mxu0 0.0
  %39 = vmatpush1.msra.mxu0 0.0
  %40 = vmatprep.subr.mxu0 0.0
  %41 = vmatpush1.msra.mxu0 0.0
  %42 = vmatprep.subr.mxu0 0.0
  %43 = vmatpush1.msra.mxu0 0.0
  %44 = vmatprep.subr.mxu0 0.0
  %45 = vmatpush1.msra.mxu0 0.0
  %46 = vmatprep.subr.mxu0 0.0
  %47 = vmatpush1.msra.mxu0 0.0
  %48 = vmatprep.subr.mxu0 0.0
  %49 = vmatpush1.msra.mxu0 0.0
  %50 = vmatprep.subr.mxu0 0.0
  %51 = vmatpush1.msra.mxu0 0.0
  %52 = vmatprep.subr.mxu0 0.0
  %53 = vmatpush1.msra.mxu0 0.0
  %54 = vmatprep.subr.mxu0 0.0
  %55 = vmatpush1.msra.mxu0 0.0
  %56 = vmatprep.subr.mxu0 0.0
  %57 = vmatpush1.msra.mxu0 0.0
  %58 = vmatprep.subr.mxu0 0.0
  %59 = vmatpush1.msra.mxu0 0.0
  %60 = vmatprep.subr.mxu0 0.0
  %61 = vmatpush1.msra.mxu0 0.0
  %62 = vmatprep.subr.mxu0 0.0
  %63 = vmatpush1.msra.mxu0 0.0
  %64 = vmatprep.subr.mxu0 0.0
  %65 = vmatpush1.msra.mxu0 0.0
  %66 = vmatprep.subr.mxu0 0.0
  %67 = vmatpush1.msra.mxu0 0.0
  %68 = vmatprep.subr.mxu0 0.0
  %69 = vmatpush1.msra.mxu0 0.0
  %70 = vmatprep.subr.mxu0 0.0
  %71 = vmatpush1.msra.mxu0 0.0
  %72 = vmatprep.subr.mxu0 0.0
  %73 = vmatpush1.msra.mxu0 0.0
  %74 = vmatprep.subr.mxu0 0.0
  %75 = vmatpush1.msra.mxu0 0.0
  %76 = vmatprep.subr.mxu0 0.0
  %77 = vmatpush1.msra.mxu0 0.0
  %78 = vmatprep.subr.mxu0 0.0
  %79 = vmatpush1.msra.mxu0 0.0
  %80 = vmatprep.subr.mxu0 0.0
  %81 = vmatpush1.msra.mxu0 0.0
  %82 = vmatprep.mubr.f32.mxu0 0.0
  %83 = vmatmul.mubr.f32.gmra.mrb[0].mxu0 %v13
  %v84 = vpop.f32.mrb[0].mxu0
  %v85 = vadd.f32 0.0, %v84
  %v86 = vpop.f32.mrb[0].mxu0
  %87 = vmatprep.mubr.f32.mxu0 0.0
  %88 = vmatmul.mubr.f32.gmra.mrb[0].mxu0 %v16
  %v89 = vpop.f32.mrb[0].mxu0
  %v90 = vadd.f32 0.0, %v89
  %v91 = vpop.f32.mrb[0].mxu0
  %92 = vdwg.mxu0
  %93 = vst.msk [vmem:[%s1] sm:$0xff] %vm11, %v85
  %94 = vst.msk [vmem:[%s1 + $0x8] sm:$0xff] %vm11, %v90
  // Predicated region
  $region6: #{fused_attn.1} parent=0 // pred_check
    _
  $region7: #{fused_attn.1} parent=0 // pred_check_branch
    %96 = sbr.rel (0) target = $region9
  $region8: #{fused_attn.1} parent=0 // pred_region
    _
  $region9: #{fused_attn.1} parent=0 // pred_fallthru
    _
  // Predicated region
  $region10: #{fused_attn.1} parent=0 // pred_check
    _
  $region11: #{fused_attn.1} parent=0 // pred_check_branch
    %98 = sbr.rel (0) target = $region13
  $region12: #{fused_attn.1} parent=0 // pred_region
    _
  $region13: #{fused_attn.1} parent=0 // pred_fallthru
    _

</llo_original>
